<compile_context>
chip_gen: v7x
topology: tpu7x:2x2x1
jax: 0.10.0
libtpu: 0.0.40
codegen_flags: <defaults>
</compile_context>

<pallas_src>
import functools
import math

import jax
import jax.numpy as jnp
from jax.experimental import pallas as pl
from jax.experimental.pallas import tpu as pltpu

_VMEM_LIMIT = 48 * 1024 * 1024  # fits under v7x's 64 MiB physical VMEM


# ----------------------------- helpers ------------------------------------- #

def _round_up(x, m):
    return ((x + m - 1) // m) * m


def _pick_tile(dim, target, quantum):
    """Largest multiple of `quantum` <= target that divides `dim`; else full dim
    (a block equal to the full array dim is always legal)."""
    if dim <= target:
        return dim
    t = (target // quantum) * quantum
    while t >= quantum:
        if dim % t == 0:
            return t
        t -= quantum
    return dim


def _pad_hidden(h):
    """Tile-friendly hidden width: 4304 -> 4608 (multiple of 512) at production
    size; small widths just round to the 128-lane quantum."""
    return _round_up(h, 512) if h > 512 else _round_up(h, 128)


def _gelu_tanh(y):
    # GELU(approximate='tanh'), exactly PyTorch's formula (f32 math).
    c = 0.7978845608028654  # sqrt(2/pi)
    return 0.5 * y * (1.0 + jnp.tanh(c * (y + 0.044715 * y * y * y)))


# ----------------------------- fused linear kernel -------------------------- #

def _linear_kernel(*refs, activation, has_ln, has_res, has_pos, multi_k, eps):
    it = iter(refs)
    x_ref = next(it)
    w_ref = next(it)
    b_ref = next(it)
    g_ref = next(it) if has_ln else None
    bt_ref = next(it) if has_ln else None
    p_ref = next(it) if has_pos else None
    r_ref = next(it) if has_res else None
    o_ref = next(it)
    xn_ref = next(it) if has_ln else None
    acc_ref = next(it) if multi_k else None

    j = pl.program_id(1)
    k = pl.program_id(2)

    if has_ln:
        # LayerNorm computed once per row tile (at j == 0) and cached in VMEM;
        # all column tiles j reuse the cached bf16 normalized activations.
        # (The column axis is marked "arbitrary" so a core always sees j==0
        # before j>0 for its row tiles.)
        @pl.when(j == 0)
        def _ln():
            xf = x_ref[...].astype(jnp.float32)
            mean = jnp.mean(xf, axis=-1, keepdims=True)
            xc = xf - mean
            var = jnp.mean(xc * xc, axis=-1, keepdims=True)
            xn = (xc * jax.lax.rsqrt(var + eps)) * g_ref[...] + bt_ref[...]
            xn_ref[...] = xn.astype(jnp.bfloat16)

        x = xn_ref[...]
    else:
        x = x_ref[...].astype(jnp.bfloat16)

    def _epilogue(y):
        y = y + b_ref[...]
        if activation == "gelu_tanh":
            y = _gelu_tanh(y)
        if has_pos:
            y = y + p_ref[...]
        if has_res:
            y = y + r_ref[...].astype(jnp.float32)
        o_ref[...] = y.astype(o_ref.dtype)

    if not multi_k:
        # Single K step: no accumulator scratch, no zero-init, no RMW.
        _epilogue(jnp.dot(x, w_ref[...], preferred_element_type=jnp.float32))
    else:
        @pl.when(k == 0)
        def _init():
            acc_ref[...] = jnp.zeros_like(acc_ref)

        acc_ref[...] += jnp.dot(x, w_ref[...], preferred_element_type=jnp.float32)

        @pl.when(k == pl.num_programs(2) - 1)
        def _finalize():
            _epilogue(acc_ref[...])


def linear(x, w, b, *, gamma=None, beta=None, pos=None, residual=None,
           activation=None, out_dtype=jnp.float32,
           tile_m=512, tile_n=512, tile_k=2304, eps=1e-5):
    """y = [LN(x)] @ w + b  [-> GELU-tanh]  [+ pos]  [+ residual].

    x: (M, K) f32/bf16, w: (K, N) (cast to bf16), b: (N,).  M must be a multiple
    of the chosen row tile (the caller pads the token axis once up-front).
    `pos` is an optional (pos_rows, N) f32 array added row-periodically
    (pos_rows must divide M)."""
    M, K = x.shape
    K2, Nout = w.shape
    assert K == K2
    has_ln = gamma is not None
    has_res = residual is not None
    has_pos = pos is not None

    if has_pos:
        pos_rows = pos.shape[0]
        tm = _pick_tile(pos_rows, tile_m, 8)   # tm | pos_rows | M
        n_pos_blocks = pos_rows // tm
    else:
        tm = _pick_tile(M, tile_m, 8)
    tn = _pick_tile(Nout, tile_n, 128)
    tk = K if has_ln else _pick_tile(K, tile_k, 128)   # LN needs the full row
    nm, nn, nk = M // tm, Nout // tn, K // tk
    multi_k = nk > 1

    w = w.astype(jnp.bfloat16)
    b2 = b.astype(jnp.float32).reshape(1, Nout)

    in_specs = [
        pl.BlockSpec((tm, tk), lambda i, j, k: (i, k)),   # x
        pl.BlockSpec((tk, tn), lambda i, j, k: (k, j)),   # w
        pl.BlockSpec((1, tn), lambda i, j, k: (0, j)),    # b
    ]
    operands = [x, w, b2]
    if has_ln:
        in_specs += [pl.BlockSpec((1, tk), lambda i, j, k: (0, k)),
                     pl.BlockSpec((1, tk), lambda i, j, k: (0, k))]
        operands += [gamma.astype(jnp.float32).reshape(1, K),
                     beta.astype(jnp.float32).reshape(1, K)]
    if has_pos:
        if n_pos_blocks == 1:
            pos_map = lambda i, j, k: (0, j)
        else:
            pos_map = lambda i, j, k: (i % n_pos_blocks, j)
        in_specs += [pl.BlockSpec((tm, tn), pos_map)]
        operands += [pos.astype(jnp.float32)]
    if has_res:
        in_specs += [pl.BlockSpec((tm, tn), lambda i, j, k: (i, j))]
        operands += [residual]

    scratch_shapes = []
    if has_ln:
        scratch_shapes.append(pltpu.VMEM((tm, K), jnp.bfloat16))   # LN cache
    if multi_k:
        scratch_shapes.append(pltpu.VMEM((tm, tn), jnp.float32))   # K accumulator

    # LN caching relies on a core visiting j==0 before j>0 for a given row tile,
    # so only the row axis is megacore-parallel when LN is fused.
    dims = (("parallel", "arbitrary", "arbitrary") if has_ln
            else ("parallel", "parallel", "arbitrary"))

    return pl.pallas_call(
        functools.partial(_linear_kernel, activation=activation, has_ln=has_ln,
                          has_res=has_res, has_pos=has_pos, multi_k=multi_k,
                          eps=eps),
        out_shape=jax.ShapeDtypeStruct((M, Nout), out_dtype),
        grid=(nm, nn, nk),
        in_specs=in_specs,
        out_specs=pl.BlockSpec((tm, tn), lambda i, j, k: (i, j)),
        scratch_shapes=scratch_shapes,
        compiler_params=pltpu.CompilerParams(
            dimension_semantics=dims,
            vmem_limit_bytes=_VMEM_LIMIT),
    )(*operands)


# ----------------------------- layernorm (final norm only) ------------------ #

def _layernorm_kernel(x_ref, g_ref, b_ref, o_ref, *, eps):
    x = x_ref[...].astype(jnp.float32)
    mean = jnp.mean(x, axis=-1, keepdims=True)
    xc = x - mean
    var = jnp.mean(xc * xc, axis=-1, keepdims=True)
    o_ref[...] = ((xc * jax.lax.rsqrt(var + eps)) * g_ref[...] + b_ref[...]
                  ).astype(o_ref.dtype)


def layernorm(x, gamma, beta, *, eps=1e-5, tile_m=512):
    M, C = x.shape
    tm = _pick_tile(M, tile_m, 8)
    return pl.pallas_call(
        functools.partial(_layernorm_kernel, eps=eps),
        out_shape=jax.ShapeDtypeStruct((M, C), jnp.float32),
        grid=(M // tm,),
        in_specs=[pl.BlockSpec((tm, C), lambda i: (i, 0)),
                  pl.BlockSpec((1, C), lambda i: (0, 0)),
                  pl.BlockSpec((1, C), lambda i: (0, 0))],
        out_specs=pl.BlockSpec((tm, C), lambda i: (i, 0)),
        compiler_params=pltpu.CompilerParams(dimension_semantics=("parallel",)),
    )(x, gamma.astype(jnp.float32).reshape(1, C),
      beta.astype(jnp.float32).reshape(1, C))


# ----------------------------- attention ------------------------------------ #

def _sdpa_kernel(q_ref, k_ref, v_ref, o_ref, *, num_heads, head_dim, n_valid):
    n_kv = k_ref.shape[0]
    if n_valid < n_kv:
        key_ids = jax.lax.broadcasted_iota(jnp.int32, (1, n_kv), 1)
        key_mask = key_ids < n_valid            # mask padded key tokens
    else:
        key_mask = None

    for h in range(num_heads):
        sl = slice(h * head_dim, (h + 1) * head_dim)
        q = q_ref[:, sl]                        # (tq, Dh) bf16
        k = k_ref[:, sl]                        # (n_kv, Dh) bf16
        v = v_ref[:, sl]
        # 1/sqrt(head_dim) is pre-folded into the Q projection weights.
        s = jax.lax.dot_general(q, k, (((1,), (1,)), ((), ())),
                                preferred_element_type=jnp.float32)
        if key_mask is not None:
            s = jnp.where(key_mask, s, -1e30)
        m = jnp.max(s, axis=-1, keepdims=True)
        p = jnp.exp(s - m)
        inv = pl.reciprocal(jnp.sum(p, axis=-1, keepdims=True), approx=True)
        pv = jnp.dot(p.astype(jnp.bfloat16), v, preferred_element_type=jnp.float32)
        # Direct per-head store: no 16-way concat / extra (tq, C) copy.
        o_ref[:, sl] = (pv * inv).astype(o_ref.dtype)


def sdpa_fused(qkv, *, batch, n_pad, n_valid, num_heads, head_dim,
               tile_q=256, out_dtype=jnp.bfloat16):
    """F.scaled_dot_product_attention reading q/k/v straight out of the (M, 3C)
    qkv matrix (column blocks 0/1/2) and writing head-interleaved (M, C).
    Grid is (batch, q-tiles) so multiple TensorCores stay busy even at B=1."""
    M, three_c = qkv.shape
    C = num_heads * head_dim
    assert three_c == 3 * C and M == batch * n_pad
    tq = _pick_tile(n_pad, tile_q, 8)
    n_q = n_pad // tq
    return pl.pallas_call(
        functools.partial(_sdpa_kernel, num_heads=num_heads, head_dim=head_dim,
                          n_valid=n_valid),
        out_shape=jax.ShapeDtypeStruct((M, C), out_dtype),
        grid=(batch, n_q),
        in_specs=[pl.BlockSpec((tq, C), lambda b, qi: (b * n_q + qi, 0)),  # q
                  pl.BlockSpec((n_pad, C), lambda b, qi: (b, 1)),          # k
                  pl.BlockSpec((n_pad, C), lambda b, qi: (b, 2))],         # v
        out_specs=pl.BlockSpec((tq, C), lambda b, qi: (b * n_q + qi, 0)),
        compiler_params=pltpu.CompilerParams(
            dimension_semantics=("parallel", "parallel"),
            vmem_limit_bytes=_VMEM_LIMIT),
    )(qkv, qkv, qkv)


# ----------------------------- model glue ----------------------------------- #

def init_params(key, *, in_dim, embed_dim, seq_len, depth, num_heads, mlp_hidden):
    """Deterministic synthetic parameters matching the module's tensor shapes.
    Weights stored bf16 (MXU inputs), biases / LN params / pos_embed in f32.

    Parameter-prep fusions (numerically exact):
      * 1/sqrt(head_dim) folded into the Q columns of qkv_w / qkv_b.
      * mlp_hidden zero-padded to a tile-friendly width (padded fc1 bias entries
        are zero -> GELU(0)=0, padded fc2 rows are zero -> exact)."""
    keys = jax.random.split(key, 4 + depth)
    head_dim = embed_dim // num_heads
    hidden_pad = _pad_hidden(mlp_hidden)

    def dense(k, fan_in, fan_out):
        kw, kb = jax.random.split(k)
        w = jax.random.normal(kw, (fan_in, fan_out), jnp.float32) / math.sqrt(fan_in)
        b = jax.random.normal(kb, (fan_out,), jnp.float32) * 0.01
        return w, b

    params = {}
    pw, pb = dense(keys[0], in_dim, embed_dim)
    params["patch_w"], params["patch_b"] = pw.astype(jnp.bfloat16), pb
    params["pos_embed"] = jax.random.normal(
        keys[1], (1, seq_len, embed_dim), jnp.float32) * 0.02
    params["norm_g"] = jnp.ones((embed_dim,), jnp.float32)
    params["norm_b"] = jnp.zeros((embed_dim,), jnp.float32)

    q_scale = 1.0 / math.sqrt(head_dim)
    col_scale = jnp.concatenate(
        [jnp.full((embed_dim,), q_scale, jnp.float32),
         jnp.ones((2 * embed_dim,), jnp.float32)])

    blocks = []
    for d in range(depth):
        bk = jax.random.split(keys[4 + d], 4)
        blk = {}

        qkv_w, qkv_b = dense(bk[0], embed_dim, 3 * embed_dim)
        qkv_w = qkv_w * col_scale[None, :]      # fold SDPA scale into Q proj
        qkv_b = qkv_b * col_scale
        blk["qkv_w"], blk["qkv_b"] = qkv_w.astype(jnp.bfloat16), qkv_b

        proj_w, proj_b = dense(bk[1], embed_dim, embed_dim)
        blk["proj_w"], blk["proj_b"] = proj_w.astype(jnp.bfloat16), proj_b

        fc1_w, fc1_b = dense(bk[2], embed_dim, mlp_hidden)
        fc2_w, fc2_b = dense(bk[3], mlp_hidden, embed_dim)
        hp = hidden_pad - mlp_hidden
        if hp:
            fc1_w = jnp.pad(fc1_w, ((0, 0), (0, hp)))   # zero cols
            fc1_b = jnp.pad(fc1_b, ((0, hp),))          # zero bias  (GELU(0)=0)
            fc2_w = jnp.pad(fc2_w, ((0, hp), (0, 0)))   # zero rows  -> exact
        blk["fc1_w"], blk["fc1_b"] = fc1_w.astype(jnp.bfloat16), fc1_b
        blk["fc2_w"], blk["fc2_b"] = fc2_w.astype(jnp.bfloat16), fc2_b

        blk["ln1_g"] = jnp.ones((embed_dim,), jnp.float32)
        blk["ln1_b"] = jnp.zeros((embed_dim,), jnp.float32)
        blk["ln2_g"] = jnp.ones((embed_dim,), jnp.float32)
        blk["ln2_b"] = jnp.zeros((embed_dim,), jnp.float32)
        blocks.append(blk)
    params["blocks"] = blocks
    return params


def vision_transformer(x, params, *, num_heads):
    """x: (B, N, in_dim) -> (B, N, embed_dim). Mirrors VisionTransformer.forward."""
    B, N, Cin = x.shape
    C = params["patch_w"].shape[1]
    H = num_heads
    Dh = C // H

    # Pad the token axis once: row tiles divide evenly, attention blocks are
    # sublane-aligned, padded key tokens are masked inside SDPA.
    n_pad = _round_up(N, 256) if N > 128 else _round_up(N, 8)
    pad = n_pad - N
    if pad:
        x = jnp.pad(x, ((0, 0), (0, pad), (0, 0)))
    M = B * n_pad

    pos = params["pos_embed"].reshape(-1, C)
    if pad:
        pos = jnp.pad(pos, ((0, pad), (0, 0)))           # (n_pad, C)

    # patch_embed (Linear) with the pos_embed add fused into its epilogue;
    # the f32 residual stream x2 lives as a flat (M, C) slab.
    x2 = linear(x.reshape(M, Cin), params["patch_w"], params["patch_b"], pos=pos)

    for blk in params["blocks"]:
        # x = x + proj(SDPA(qkv(LN1(x))))   -- LN fused into qkv, residual into proj
        qkv = linear(x2, blk["qkv_w"], blk["qkv_b"],
                     gamma=blk["ln1_g"], beta=blk["ln1_b"],
                     out_dtype=jnp.bfloat16)                       # (M, 3C)
        o = sdpa_fused(qkv, batch=B, n_pad=n_pad, n_valid=N,
                       num_heads=H, head_dim=Dh)                   # (M, C) bf16
        x2 = linear(o, blk["proj_w"], blk["proj_b"], residual=x2)  # (M, C) f32

        # x = x + fc2(GELU(fc1(LN2(x))))    -- LN+GELU fused into fc1, residual into fc2
        h = linear(x2, blk["fc1_w"], blk["fc1_b"],
                   gamma=blk["ln2_g"], beta=blk["ln2_b"],
                   activation="gelu_tanh", out_dtype=jnp.bfloat16)
        x2 = linear(h, blk["fc2_w"], blk["fc2_b"], residual=x2)

    x2 = layernorm(x2, params["norm_g"], params["norm_b"])
    return x2.reshape(B, n_pad, C)[:, :N, :]


# ----------------------------- main ------------------------------------------ #

if __name__ == "__main__":
    # Small config structurally identical to the module
    # (full size: in=588, embed=1152, seq=729, depth=27, heads=16, mlp=4304).
    # N=60 deliberately not a multiple of 8 so the pad + key-mask path is exercised.
    B, N, IN_DIM = 2, 60, 64
    EMBED_DIM, HEADS, MLP_HIDDEN, DEPTH = 128, 4, 256, 2

    key = jax.random.PRNGKey(0)
    kx, kp = jax.random.split(key)
    x = jax.random.normal(kx, (B, N, IN_DIM), jnp.float32)
    params = init_params(kp, in_dim=IN_DIM, embed_dim=EMBED_DIM, seq_len=N,
                         depth=DEPTH, num_heads=HEADS, mlp_hidden=MLP_HIDDEN)

    out = vision_transformer(x, params, num_heads=HEADS)
    jax.block_until_ready(out)
    assert out.shape == (B, N, EMBED_DIM)
    assert bool(jnp.all(jnp.isfinite(out)))
    print("KERNEL_OK")
</pallas_src>

<mosaic_0001>
module attributes {stable_mosaic.version = 11 : i64} {
  func.func @_linear_kernel(%arg0: i32, %arg1: i32, %arg2: i32, %arg3: memref<64x64xf32, #tpu.memory_space<vmem>>, %arg4: memref<64x128xbf16, #tpu.memory_space<vmem>>, %arg5: memref<1x128xf32, #tpu.memory_space<vmem>>, %arg6: memref<64x128xf32, #tpu.memory_space<vmem>>, %arg7: memref<64x128xf32, #tpu.memory_space<vmem>>) attributes {dimension_semantics = [#tpu.dimension_semantics<parallel>, #tpu.dimension_semantics<parallel>, #tpu.dimension_semantics<arbitrary>], iteration_bounds = array<i64: 2, 1, 1>, scalar_prefetch = 0 : i64, scratch_operands = 0 : i64, tpu.core_type = #tpu.core_type<tc>, window_params = [{transform_indices = @transform_0, window_bounds = array<i64: 64, 64>}, {transform_indices = @transform_1, window_bounds = array<i64: 64, 128>}, {transform_indices = @transform_2, window_bounds = array<i64: 1, 128>}, {transform_indices = @transform_3, window_bounds = array<i64: 64, 128>}, {transform_indices = @transform_4, window_bounds = array<i64: 64, 128>}]} {
    %c0 = arith.constant 0 : index
    %c0_0 = arith.constant 0 : index
    %0 = vector.load %arg3[%c0, %c0_0] : memref<64x64xf32, #tpu.memory_space<vmem>>, vector<64x64xf32>
    %1 = arith.truncf %0 : vector<64x64xf32> to vector<64x64xbf16>
    %c0_1 = arith.constant 0 : index
    %c0_2 = arith.constant 0 : index
    %2 = vector.load %arg4[%c0_1, %c0_2] : memref<64x128xbf16, #tpu.memory_space<vmem>>, vector<64x128xbf16>
    %cst = arith.constant dense<0.000000e+00> : vector<64x128xf32>
    %3 = tpu.matmul %1, %2, %cst {dimension_numbers = #tpu.dot_dimension_numbers<[1], [0], [0], [1], [0, 0, 1, 1], [], []>} : vector<64x64xbf16>, vector<64x128xbf16>, vector<64x128xf32> -> vector<64x128xf32>
    %c0_3 = arith.constant 0 : index
    %c0_4 = arith.constant 0 : index
    %4 = vector.load %arg5[%c0_3, %c0_4] : memref<1x128xf32, #tpu.memory_space<vmem>>, vector<1x128xf32>
    %5 = vector.broadcast %4 : vector<1x128xf32> to vector<64x128xf32>
    %6 = arith.addf %3, %5 : vector<64x128xf32>
    %c0_5 = arith.constant 0 : index
    %c0_6 = arith.constant 0 : index
    %7 = vector.load %arg6[%c0_5, %c0_6] : memref<64x128xf32, #tpu.memory_space<vmem>>, vector<64x128xf32>
    %8 = arith.addf %6, %7 : vector<64x128xf32>
    %c0_7 = arith.constant 0 : index
    %c0_8 = arith.constant 0 : index
    %9 = vector.load %arg7[%c0_7, %c0_8] : memref<64x128xf32, #tpu.memory_space<vmem>>, vector<64x128xf32>
    tpu.vector_store %arg7[%c0_7, %c0_8], %8 {strides = array<i32>} : memref<64x128xf32, #tpu.memory_space<vmem>>, vector<64x128xf32>,
    return
  }
  func.func @transform_0(%arg0: i32, %arg1: i32, %arg2: i32) -> (i32, i32) {
    %c0_i32 = arith.constant 0 : i32
    return %arg0, %arg2 : i32, i32
  }
  func.func @transform_1(%arg0: i32, %arg1: i32, %arg2: i32) -> (i32, i32) {
    %c0_i32 = arith.constant 0 : i32
    return %arg2, %arg1 : i32, i32
  }
  func.func @transform_2(%arg0: i32, %arg1: i32, %arg2: i32) -> (i32, i32) {
    %c0_i32 = arith.constant 0 : i32
    %c0_i32_0 = arith.constant 0 : i32
    return %c0_i32, %arg1 : i32, i32
  }
  func.func @transform_3(%arg0: i32, %arg1: i32, %arg2: i32) -> (i32, i32) {
    %c0_i32 = arith.constant 0 : i32
    %c0_i32_0 = arith.constant 0 : i32
    return %c0_i32, %arg1 : i32, i32
  }
  func.func @transform_4(%arg0: i32, %arg1: i32, %arg2: i32) -> (i32, i32) {
    %c0_i32 = arith.constant 0 : i32
    return %arg0, %arg1 : i32, i32
  }
}

</mosaic_0001>

<llo_original>
// kernel: tpu_custom_call.1
$region0: #{tpu_custom_call.1}
  #allocation0 [shape = 'u32[]', space=smem, size = 0x4, offset = 0x4, fixed_abs, tag = 'smem constant byte address 0x4 - core index']
  #allocation1 [shape = 'u32[144,128]{1,0:T(1,128)}', space=vmem, size = 0x12000, scoped, tag = 'internal scratch']
  %s0 = inlined_call_operand.vmem [shape: f32[128,64], index: 0, kind: input, shape index: {}]
  %s1 = inlined_call_operand.vmem [shape: bf16[64,128], index: 1, kind: input, shape index: {}]
  %s2 = inlined_call_operand.vmem [shape: f32[1,128], index: 2, kind: input, shape index: {}]
  %s3 = inlined_call_operand.vmem [shape: f32[64,128], index: 3, kind: input, shape index: {}]
  %s4 = inlined_call_operand.hbm [shape: f32[128,128], index: 4, kind: output, shape index: {}]
  %s5 = sld [smem:[#allocation0]]
  $region49: #{tpu_custom_call.1} parent=0
    _
  %s7 = ssub.s32 1, %s5
  %s8 = scalar_select 0, %s7, %s5
  $region1: #{tpu_custom_call.1} parent=0
    #allocation2 [shape = 'u8[65536]{0}', space=vmem, size = 0x10000, scoped, tag = 'output window, operand 0']
    #allocation3 [shape = 's32[2]{0}', space=sflag, size = 0x8, scoped, tag = 'scoped memory for tpu_custom_call.1']
    %9 = vsyncpa [#allocation3], 0
    %s10 = scalar_lea.sflag [#allocation3], 1
    %11 = vsyncpa %s10, 0
    loop: start=0, step=1, limit=4
    $region2: #{tpu_custom_call.1} parent=1 // loop_pre_header
      _
    $region3: #{tpu_custom_call.1} parent=1 // loop_header
      %s13 = sphi 0, %s17
      %p14 = scmp.ge.s32.totalorder %s13, 4
      %s20 = sphi 0, %s39
      %s21 = sphi 0, %s35
      %s22 = sphi 0, %s31
      %s23 = sphi 0, %s20
      %s24 = sphi 0, %s21
      %s25 = sphi 0, %s22
      %s26 = sphi 0, %s23
      %s27 = sphi 0, %s24
      %s28 = sphi 0, %s25
      %s44 = sphi 0, %s46
      %s47 = sphi 0, %s44
      %s48 = sphi 0, %s47
      %s64 = sphi 0, %s48
      %s72 = sphi 0, %s74
      %s75 = sphi 0, %s72
      %s76 = sphi 0, %s75
      %s92 = sphi 0, %s76
      %s98 = sphi 0, %s100
      %s101 = sphi 0, %s98
      %s102 = sphi 0, %s101
      %s118 = sphi 0, %s102
      %s124 = sphi 0, %s126
      %s127 = sphi 0, %s124
      %s128 = sphi 0, %s127
      %s144 = sphi 0, %s128
      %s152 = sphi 0, %s154
      %s155 = sphi 0, %s152
      %s156 = sphi 0, %s155
      %s172 = sphi 0, %s156
    $region4: #{tpu_custom_call.1} parent=1 // loop_header_branch
      %16 = sbr.rel (%p14) target = $region8
    $region5: #{tpu_custom_call.1} parent=1 // loop_body
      %s18 = ssub.s32 %s13, 1
      %s19 = ssub.s32 %s13, 2
      %s29 = sadd.s32 1, %s22
      %p30 = scmp.ge.s32.totalorder %s29, 1
      %s31 = scalar_select %p30, 0, %s29
      %s32 = sadd.s32 1, %s21
      %s33 = scalar_select %p30, %s32, %s21
      %p34 = scmp.ge.s32.totalorder %s33, 1
      %s35 = scalar_select %p34, 0, %s33
      %s36 = sadd.s32 1, %s20
      %s37 = scalar_select %p34, %s36, %s20
      %p38 = scmp.ge.s32.totalorder %s37, 2
      %s39 = scalar_select %p38, 0, %s37
      %s40 = ssub.s32 %s20, %s39
      %s41 = ssub.s32 %s22, %s31
      %s42 = sor.u32 %s40, %s41
      %p43 = scmp.eq.s32.totalorder %s42, 0
      %s45 = sadd.s32 %s44, 1
      %s46 = scalar_select %p43, %s44, %s45
      %p49 = pneg %p43
      %p50 = scmp.eq.s32.totalorder %s13, 1
      %p51 = por %p49, %p50
      %p52 = scmp.ne.s32.totalorder %s44, %s47
      %p53 = scmp.eq.s32.totalorder %s13, 0
      %p54 = por %p52, %p53
      %p55 = scmp.ne.s32.totalorder %s44, %s47
      %p56 = scmp.eq.s32.totalorder %s18, 1
      %p57 = por %p55, %p56
      %p58 = scmp.ne.s32.totalorder %s47, %s48
      %p59 = scmp.eq.s32.totalorder %s18, 0
      %p60 = por %p58, %p59
      %p61 = scmp.ne.s32.totalorder %s47, %s48
      %p62 = scmp.eq.s32.totalorder %s19, 1
      %p63 = por %p61, %p62
      %p65 = scmp.ne.s32.totalorder %s48, %s64
      %p66 = scmp.eq.s32.totalorder %s19, 0
      %p67 = por %p65, %p66
      %s68 = ssub.s32 %s22, %s31
      %s69 = ssub.s32 %s21, %s35
      %s70 = sor.u32 %s68, %s69
      %p71 = scmp.eq.s32.totalorder %s70, 0
      %s73 = sadd.s32 %s72, 1
      %s74 = scalar_select %p71, %s72, %s73
      %p77 = pneg %p71
      %p78 = scmp.eq.s32.totalorder %s13, 1
      %p79 = por %p77, %p78
      %p80 = scmp.ne.s32.totalorder %s72, %s75
      %p81 = scmp.eq.s32.totalorder %s13, 0
      %p82 = por %p80, %p81
      %p83 = scmp.ne.s32.totalorder %s72, %s75
      %p84 = scmp.eq.s32.totalorder %s18, 1
      %p85 = por %p83, %p84
      %p86 = scmp.ne.s32.totalorder %s75, %s76
      %p87 = scmp.eq.s32.totalorder %s18, 0
      %p88 = por %p86, %p87
      %p89 = scmp.ne.s32.totalorder %s75, %s76
      %p90 = scmp.eq.s32.totalorder %s19, 1
      %p91 = por %p89, %p90
      %p93 = scmp.ne.s32.totalorder %s76, %s92
      %p94 = scmp.eq.s32.totalorder %s19, 0
      %p95 = por %p93, %p94
      %s96 = ssub.s32 %s21, %s35
      %p97 = scmp.eq.s32.totalorder %s96, 0
      %s99 = sadd.s32 %s98, 1
      %s100 = scalar_select %p97, %s98, %s99
      %p103 = pneg %p97
      %p104 = scmp.eq.s32.totalorder %s13, 1
      %p105 = por %p103, %p104
      %p106 = scmp.ne.s32.totalorder %s98, %s101
      %p107 = scmp.eq.s32.totalorder %s13, 0
      %p108 = por %p106, %p107
      %p109 = scmp.ne.s32.totalorder %s98, %s101
      %p110 = scmp.eq.s32.totalorder %s18, 1
      %p111 = por %p109, %p110
      %p112 = scmp.ne.s32.totalorder %s101, %s102
      %p113 = scmp.eq.s32.totalorder %s18, 0
      %p114 = por %p112, %p113
      %p115 = scmp.ne.s32.totalorder %s101, %s102
      %p116 = scmp.eq.s32.totalorder %s19, 1
      %p117 = por %p115, %p116
      %p119 = scmp.ne.s32.totalorder %s102, %s118
      %p120 = scmp.eq.s32.totalorder %s19, 0
      %p121 = por %p119, %p120
      %s122 = ssub.s32 %s21, %s35
      %p123 = scmp.eq.s32.totalorder %s122, 0
      %s125 = sadd.s32 %s124, 1
      %s126 = scalar_select %p123, %s124, %s125
      %p129 = pneg %p123
      %p130 = scmp.eq.s32.totalorder %s13, 1
      %p131 = por %p129, %p130
      %p132 = scmp.ne.s32.totalorder %s124, %s127
      %p133 = scmp.eq.s32.totalorder %s13, 0
      %p134 = por %p132, %p133
      %p135 = scmp.ne.s32.totalorder %s124, %s127
      %p136 = scmp.eq.s32.totalorder %s18, 1
      %p137 = por %p135, %p136
      %p138 = scmp.ne.s32.totalorder %s127, %s128
      %p139 = scmp.eq.s32.totalorder %s18, 0
      %p140 = por %p138, %p139
      %p141 = scmp.ne.s32.totalorder %s127, %s128
      %p142 = scmp.eq.s32.totalorder %s19, 1
      %p143 = por %p141, %p142
      %p145 = scmp.ne.s32.totalorder %s128, %s144
      %p146 = scmp.eq.s32.totalorder %s19, 0
      %p147 = por %p145, %p146
      %s148 = ssub.s32 %s20, %s39
      %s149 = ssub.s32 %s21, %s35
      %s150 = sor.u32 %s148, %s149
      %p151 = scmp.eq.s32.totalorder %s150, 0
      %s153 = sadd.s32 %s152, 1
      %s154 = scalar_select %p151, %s152, %s153
      %p157 = pneg %p151
      %p158 = scmp.eq.s32.totalorder %s13, 1
      %p159 = por %p157, %p158
      %p160 = scmp.ne.s32.totalorder %s152, %s155
      %p161 = scmp.eq.s32.totalorder %s13, 0
      %p162 = por %p160, %p161
      %p163 = scmp.ne.s32.totalorder %s152, %s155
      %p164 = scmp.eq.s32.totalorder %s18, 1
      %p165 = por %p163, %p164
      %p166 = scmp.ne.s32.totalorder %s155, %s156
      %p167 = scmp.eq.s32.totalorder %s18, 0
      %p168 = por %p166, %p167
      %p169 = scmp.ne.s32.totalorder %s155, %s156
      %p170 = scmp.eq.s32.totalorder %s19, 1
      %p171 = por %p169, %p170
      %p173 = scmp.ne.s32.totalorder %s156, %s172
      %p174 = scmp.eq.s32.totalorder %s19, 0
      %p175 = por %p173, %p174
      %p176 = scmp.le.s32.totalorder 1, %s13
      %p177 = scmp.lt.s32.totalorder %s13, 3
      %p178 = pnand %p176, %p177
      %p179 = pneg %p178
      // Predicated region
      $region9: #{tpu_custom_call.1} parent=5 // pred_check
        _
      $region10: #{tpu_custom_call.1} parent=5 // pred_check_branch
        %181 = sbr.rel (%p178) target = $region12
      $region11: #{tpu_custom_call.1} parent=5 // pred_region
        %s182 = ssub.s32 %s13, 1
        // Predicated region
        $region13: #{tpu_custom_call.1} parent=11 // pred_check
          %p183 = pneg %p88
        $region14: #{tpu_custom_call.1} parent=11 // pred_check_branch
          %185 = sbr.rel (%p183) target = $region16
        $region15: #{tpu_custom_call.1} parent=11 // pred_region
          %s186 = smul.u32 8, %s25
          %p187 = scmp.lt.s32.totalorder %s186, 7
          %s188 = scalar_select %p187, %s186, 7
          %p189 = scmp.lt.s32.totalorder %s24, 0
          %s190 = scalar_select %p189, %s24, 0
          %s191 = sadd.s32 %s190, %s188
          %s192 = smul.addr %s191, 4
          %s193 = scalar_lea.vmem %s1, %s192
          %s194 = smul.u32 8, %s25
        $region16: #{tpu_custom_call.1} parent=11 // pred_fallthru
          _
        // Predicated region
        $region17: #{tpu_custom_call.1} parent=11 // pred_check
          %p195 = pneg %p114
        $region18: #{tpu_custom_call.1} parent=11 // pred_check_branch
          %197 = sbr.rel (%p195) target = $region20
        $region19: #{tpu_custom_call.1} parent=11 // pred_region
          %p198 = scmp.lt.s32.totalorder %s24, 0
          %s199 = scalar_select %p198, %s24, 0
          %s200 = scalar_lea.vmem %s2, %s199
        $region20: #{tpu_custom_call.1} parent=11 // pred_fallthru
          _
        // Predicated region
        $region21: #{tpu_custom_call.1} parent=11 // pred_check
          %p201 = pneg %p140
        $region22: #{tpu_custom_call.1} parent=11 // pred_check_branch
          %203 = sbr.rel (%p201) target = $region24
        $region23: #{tpu_custom_call.1} parent=11 // pred_region
          %p204 = scmp.lt.s32.totalorder %s24, 0
          %s205 = scalar_select %p204, %s24, 0
          %s206 = smul.addr %s205, 8
          %s207 = scalar_lea.vmem %s3, %s206
        $region24: #{tpu_custom_call.1} parent=11 // pred_fallthru
          _
      $region12: #{tpu_custom_call.1} parent=5 // pred_fallthru
        _
      %p208 = scmp.lt.s32.totalorder %s13, 2
      // Predicated region
      $region25: #{tpu_custom_call.1} parent=5 // pred_check
        %p209 = pneg %p208
      $region26: #{tpu_custom_call.1} parent=5 // pred_check_branch
        %211 = sbr.rel (%p209) target = $region28
      $region27: #{tpu_custom_call.1} parent=5 // pred_region
        // Predicated region
        $region29: #{tpu_custom_call.1} parent=27 // pred_check
          %p212 = pneg %p54
        $region30: #{tpu_custom_call.1} parent=27 // pred_check_branch
          %214 = sbr.rel (%p212) target = $region32
        $region31: #{tpu_custom_call.1} parent=27 // pred_region
          %s215 = smul.u32 8, %s20
          %p216 = scmp.lt.s32.totalorder %s215, 15
          %s217 = scalar_select %p216, %s215, 15
          %p218 = scmp.lt.s32.totalorder %s22, 0
          %s219 = scalar_select %p218, %s22, 0
          %s220 = sadd.s32 %s219, %s217
          %s221 = smul.addr %s220, 8
          %s222 = scalar_lea.vmem %s0, %s221
          %s223 = smul.u32 8, %s20
        $region32: #{tpu_custom_call.1} parent=27 // pred_fallthru
          _
      $region28: #{tpu_custom_call.1} parent=5 // pred_fallthru
        _
      %p224 = scmp.le.s32.totalorder 1, %s13
      %p225 = scmp.lt.s32.totalorder %s13, 3
      %p226 = pnand %p224, %p225
      %p227 = pneg %p226
      // Predicated region
      $region33: #{tpu_custom_call.1} parent=5 // pred_check
        _
      $region34: #{tpu_custom_call.1} parent=5 // pred_check_branch
        %229 = sbr.rel (%p226) target = $region36
      $region35: #{tpu_custom_call.1} parent=5 // pred_region
        %s230 = ssub.s32 %s13, 1
        %s231 = smul.u32 8, %s23
        %p232 = scmp.lt.s32.totalorder %s231, 15
        %s233 = scalar_select %p232, %s231, 15
        %p234 = scmp.lt.s32.totalorder %s25, 0
        %s235 = scalar_select %p234, %s25, 0
        %s236 = sadd.s32 %s235, %s233
        %s237 = smul.addr %s236, 8
        %s238 = scalar_lea.vmem %s0, %s237
        %p239 = pneg %p60
        %p240 = pneg %p57
        %s241 = smul.u32 8, %s25
        %p242 = scmp.lt.s32.totalorder %s241, 7
        %s243 = scalar_select %p242, %s241, 7
        %p244 = scmp.lt.s32.totalorder %s24, 0
        %s245 = scalar_select %p244, %s24, 0
        %s246 = sadd.s32 %s245, %s243
        %s247 = smul.addr %s246, 4
        %s248 = scalar_lea.vmem %s1, %s247
        %p249 = pneg %p88
        %p250 = pneg %p85
        %p251 = scmp.lt.s32.totalorder %s24, 0
        %s252 = scalar_select %p251, %s24, 0
        %s253 = scalar_lea.vmem %s2, %s252
        %p254 = pneg %p114
        %p255 = pneg %p111
        %p256 = scmp.lt.s32.totalorder %s24, 0
        %s257 = scalar_select %p256, %s24, 0
        %s258 = smul.addr %s257, 8
        %s259 = scalar_lea.vmem %s3, %s258
        %p260 = pneg %p140
        %p261 = pneg %p137
        %p262 = pneg %p168
        %p263 = pneg %p165
        %s264 = sand.u32 %s155, 1
        %s265 = scalar_lea.sflag [#allocation3], %s264
        %s266 = sand.u32 %s155, 1
        %s267 = smul.addr %s266, 64
        %s268 = scalar_lea.vmem [#allocation2], %s267
        %s269 = smul.u32 8, %s23
        %p270 = scmp.lt.s32.totalorder %s269, 15
        %s271 = scalar_select %p270, %s269, 15
        %p272 = scmp.lt.s32.totalorder %s25, 0
        %s273 = scalar_select %p272, %s25, 0
        %s274 = sadd.s32 %s273, %s271
        %s275 = smul.addr %s274, 8
        %s276 = scalar_lea.vmem %s0, %s275
        %s277 = smul.u32 8, %s23
        %s278 = smul.u32 8, %s25
        %p279 = scmp.lt.s32.totalorder %s278, 7
        %s280 = scalar_select %p279, %s278, 7
        %p281 = scmp.lt.s32.totalorder %s24, 0
        %s282 = scalar_select %p281, %s24, 0
        %s283 = sadd.s32 %s282, %s280
        %s284 = smul.addr %s283, 4
        %s285 = scalar_lea.vmem %s1, %s284
        %s286 = smul.u32 8, %s25
        %p287 = scmp.lt.s32.totalorder %s24, 0
        %s288 = scalar_select %p287, %s24, 0
        %s289 = scalar_lea.vmem %s2, %s288
        %p290 = scmp.lt.s32.totalorder %s24, 0
        %s291 = scalar_select %p290, %s24, 0
        %s292 = smul.addr %s291, 8
        %s293 = scalar_lea.vmem %s3, %s292
        %s294 = smul.u32 8, %s23
        %v296 = vld [vmem:[%s276] sm:$0xff]
        %v297 = vld [vmem:[%s276 + $0x8] sm:$0xff]
        %v298 = vld [vmem:[%s276 + $0x10] sm:$0xff]
        %v299 = vld [vmem:[%s276 + $0x18] sm:$0xff]
        %v300 = vld [vmem:[%s276 + $0x20] sm:$0xff]
        %v301 = vld [vmem:[%s276 + $0x28] sm:$0xff]
        %v302 = vld [vmem:[%s276 + $0x30] sm:$0xff]
        %v303 = vld [vmem:[%s276 + $0x38] sm:$0xff]
        %v304 = vpack.c.bf16 %v297, %v296
        %v305 = vpack.c.bf16 %v299, %v298
        %v306 = vpack.c.bf16 %v301, %v300
        %v307 = vpack.c.bf16 %v303, %v302
        %v308 = vld [vmem:[%s285] sm:$0xf]
        %v309 = vld [vmem:[%s285 + $0x4] sm:$0xf]
        %v310 = vld [vmem:[%s285 + $0x8] sm:$0xf]
        %v311 = vld [vmem:[%s285 + $0xc] sm:$0xf]
        %v312 = vld [vmem:[%s285 + $0x10] sm:$0xf]
        %v313 = vld [vmem:[%s285 + $0x14] sm:$0xf]
        %v314 = vld [vmem:[%s285 + $0x18] sm:$0xf]
        %v315 = vld [vmem:[%s285 + $0x1c] sm:$0xf]
        %v316 = vld [vmem:[%s289] sm:$0x1]
        %v318 = vlaneseq
        %v319 = vshrl.u32 %v318, 7
        %v320 = vsub.s32 0, %v319
        %v321 = vrot.slane %v316, %v320
        %v331 = vunpack.c.l.b16 %v308
        %v332 = vunpack.c.l.b16 %v309
        %v333 = vunpack.c.l.b16 %v310
        %v334 = vunpack.c.l.b16 %v311
        %v335 = vunpack.c.l.b16 %v312
        %v336 = vunpack.c.l.b16 %v313
        %v337 = vunpack.c.l.b16 %v314
        %v338 = vunpack.c.l.b16 %v315
        %v339 = vpack.c.b16 %v332, %v331
        %v340 = vpack.c.b16 %v334, %v333
        %v341 = vpack.c.b16 %v336, %v335
        %v342 = vpack.c.b16 %v338, %v337
        %vm347 = vcmask 523264
        %v349 = vsel %vm347, %v304, 0
        %v352 = vsel %vm347, %v305, 0
        %v355 = vsel %vm347, %v306, 0
        %v358 = vsel %vm347, %v307, 0
        %360 = vmatprep.subr.bf16.mxu0 0
        %361 = vmatpush1.bf16.msra.mxu0 %v339
        %362 = vmatprep.subr.bf16.mxu0 0
        %363 = vmatpush1.bf16.msra.mxu0 %v340
        %364 = vmatprep.subr.bf16.mxu0 0
        %365 = vmatpush1.bf16.msra.mxu0 %v341
        %366 = vmatprep.subr.bf16.mxu0 0
        %367 = vmatpush1.bf16.msra.mxu0 %v342
        %368 = vmatprep.subr.bf16.mxu0 0
        %369 = vmatpush1.bf16.msra.mxu0 0
        %370 = vmatprep.subr.bf16.mxu0 0
        %371 = vmatpush1.bf16.msra.mxu0 0
        %372 = vmatprep.subr.bf16.mxu0 0
        %373 = vmatpush1.bf16.msra.mxu0 0
        %374 = vmatprep.subr.bf16.mxu0 0
        %375 = vmatpush1.bf16.msra.mxu0 0
        %376 = vmatprep.subr.bf16.mxu0 0
        %377 = vmatpush1.bf16.msra.mxu0 0
        %378 = vmatprep.subr.bf16.mxu0 0
        %379 = vmatpush1.bf16.msra.mxu0 0
        %380 = vmatprep.subr.bf16.mxu0 0
        %381 = vmatpush1.bf16.msra.mxu0 0
        %382 = vmatprep.subr.bf16.mxu0 0
        %383 = vmatpush1.bf16.msra.mxu0 0
        %384 = vmatprep.subr.bf16.mxu0 0
        %385 = vmatpush1.bf16.msra.mxu0 0
        %386 = vmatprep.subr.bf16.mxu0 0
        %387 = vmatpush1.bf16.msra.mxu0 0
        %388 = vmatprep.subr.bf16.mxu0 0
        %389 = vmatpush1.bf16.msra.mxu0 0
        %390 = vmatprep.subr.bf16.mxu0 0
        %391 = vmatpush1.bf16.msra.mxu0 0
        %392 = vmatprep.mubr.bf16.mxu0 0
        %393 = vmatmul.mubr.bf16.gmra.mrb[0].mxu0 %v349
        %v394 = vpop.f32.mrb[0].mxu0
        %v395 = vadd.f32 %v321, %v394
        %v396 = vpop.f32.mrb[0].mxu0
        %v397 = vpop.f32.mrb[0].mxu0
        %v398 = vadd.f32 %v321, %v397
        %v399 = vpop.f32.mrb[0].mxu0
        %400 = vmatprep.mubr.bf16.mxu0 0
        %401 = vmatmul.mubr.bf16.gmra.mrb[0].mxu0 %v352
        %v402 = vpop.f32.mrb[0].mxu0
        %v403 = vadd.f32 %v321, %v402
        %v404 = vpop.f32.mrb[0].mxu0
        %v405 = vpop.f32.mrb[0].mxu0
        %v406 = vadd.f32 %v321, %v405
        %v407 = vpop.f32.mrb[0].mxu0
        %408 = vmatprep.mubr.bf16.mxu0 0
        %409 = vmatmul.mubr.bf16.gmra.mrb[0].mxu0 %v355
        %v410 = vpop.f32.mrb[0].mxu0
        %v411 = vadd.f32 %v321, %v410
        %v412 = vpop.f32.mrb[0].mxu0
        %v413 = vpop.f32.mrb[0].mxu0
        %v414 = vadd.f32 %v321, %v413
        %v415 = vpop.f32.mrb[0].mxu0
        %416 = vmatprep.mubr.bf16.mxu0 0
        %417 = vmatmul.mubr.bf16.gmra.mrb[0].mxu0 %v358
        %v418 = vpop.f32.mrb[0].mxu0
        %v419 = vadd.f32 %v321, %v418
        %v420 = vpop.f32.mrb[0].mxu0
        %v421 = vpop.f32.mrb[0].mxu0
        %v422 = vadd.f32 %v321, %v421
        %v423 = vpop.f32.mrb[0].mxu0
        %424 = vdwg.mxu0
        %v425 = vld [vmem:[%s293] sm:$0xff]
        %v426 = vld [vmem:[%s293 + $0x8] sm:$0xff]
        %v427 = vld [vmem:[%s293 + $0x10] sm:$0xff]
        %v428 = vld [vmem:[%s293 + $0x18] sm:$0xff]
        %v429 = vld [vmem:[%s293 + $0x20] sm:$0xff]
        %v430 = vld [vmem:[%s293 + $0x28] sm:$0xff]
        %v431 = vld [vmem:[%s293 + $0x30] sm:$0xff]
        %v432 = vld [vmem:[%s293 + $0x38] sm:$0xff]
        %v433 = vadd.f32 %v395, %v425
        %v434 = vadd.f32 %v398, %v426
        %v435 = vadd.f32 %v403, %v427
        %v436 = vadd.f32 %v406, %v428
        %v437 = vadd.f32 %v411, %v429
        %v438 = vadd.f32 %v414, %v430
        %v439 = vadd.f32 %v419, %v431
        %v440 = vadd.f32 %v422, %v432
        %441 = vst [vmem:[%s268] sm:$0xff] %v433
        %442 = vst [vmem:[%s268 + $0x8] sm:$0xff] %v434
        %443 = vst [vmem:[%s268 + $0x10] sm:$0xff] %v435
        %444 = vst [vmem:[%s268 + $0x18] sm:$0xff] %v436
        %445 = vst [vmem:[%s268 + $0x20] sm:$0xff] %v437
        %446 = vst [vmem:[%s268 + $0x28] sm:$0xff] %v438
        %447 = vst [vmem:[%s268 + $0x30] sm:$0xff] %v439
        %448 = vst [vmem:[%s268 + $0x38] sm:$0xff] %v440
        %s449 = sand.u32 %s155, 1
        %s450 = scalar_lea.sflag [#allocation3], %s449
        %s451 = sand.u32 %s155, 1
        %s452 = smul.addr %s451, 64
        %s453 = scalar_lea.vmem [#allocation2], %s452
        // Predicated region
        $region37: #{tpu_custom_call.1} parent=35 // pred_check
          %p454 = pneg %p165
        $region38: #{tpu_custom_call.1} parent=35 // pred_check_branch
          %456 = sbr.rel (%p454) target = $region40
        $region39: #{tpu_custom_call.1} parent=35 // pred_region
          %s457 = smul.u32 8, %s23
          %s459 = ssub.s32 1024, 1024
          %460 = vsyncadd %s450, %s459
          %s461 = sadd.s32 %s24, %s457
          %s462 = smul.addr %s461, 128
          %s463 = scalar_lea.hbm %s4, %s462
          %s464 = sshll.u32 %s453, 4
          %s465 = int_to_ptr.vmem [resolvable:$true] %s464
          %470 = dma.vmem_to_hbm [thread:$0]  %s465, 1024, %s463, %s450, 128, 128, 8
        $region40: #{tpu_custom_call.1} parent=35 // pred_fallthru
          _
      $region36: #{tpu_custom_call.1} parent=5 // pred_fallthru
        _
      %p471 = scmp.le.s32.totalorder 2, %s13
      // Predicated region
      $region41: #{tpu_custom_call.1} parent=5 // pred_check
        %p472 = pneg %p471
      $region42: #{tpu_custom_call.1} parent=5 // pred_check_branch
        %474 = sbr.rel (%p472) target = $region44
      $region43: #{tpu_custom_call.1} parent=5 // pred_region
        %s475 = ssub.s32 %s13, 2
        // Predicated region
        $region45: #{tpu_custom_call.1} parent=43 // pred_check
          %p476 = pneg %p171
        $region46: #{tpu_custom_call.1} parent=43 // pred_check_branch
          %478 = sbr.rel (%p476) target = $region48
        $region47: #{tpu_custom_call.1} parent=43 // pred_region
          %s479 = sand.u32 %s156, 1
          %s480 = scalar_lea.sflag [#allocation3], %s479
          %s481 = sand.u32 %s156, 1
          %s482 = smul.addr %s481, 64
          %s483 = scalar_lea.vmem [#allocation2], %s482
          %484 = dma.done %s480, 1024
        $region48: #{tpu_custom_call.1} parent=43 // pred_fallthru
          _
      $region44: #{tpu_custom_call.1} parent=5 // pred_fallthru
        _
    $region6: #{tpu_custom_call.1} parent=1 // loop_footer
      %s17 = sadd.s32 1, %s13
    $region7: #{tpu_custom_call.1} parent=1 // loop_footer_branch
      %12 = sbr.rel target = $region3
    $region8: #{tpu_custom_call.1} parent=1 // loop_exit
      _
    %485 = vsyncpa [#allocation3], 1
    %s486 = scalar_lea.sflag [#allocation3], 1
    %487 = vsyncpa %s486, 1

</llo_original>
